<compile_context>
chip_gen: v5e
topology: v5e:2x2
jax: 0.10.0
libtpu: 0.0.40
codegen_flags: <defaults>
</compile_context>

<pallas_src>
import jax
import jax.numpy as jnp
from jax import lax
from jax.experimental import pallas as pl
from jax.experimental.pallas import tpu as pltpu

EMB_DIM = 64
LN_EPS = 1e-5


def _vmem_limit(estimate_bytes):
    # Explicit scoped-VMEM request (Mosaic defaults are only 16/32 MiB);
    # capped below the smallest physical VMEM (v7x: 64 MiB per TensorCore).
    return int(min(max(2 * estimate_bytes, 4 << 20), 60 << 20))


# --------------------------------------------------------------------------
# Kernel 1: project V and fold Wq/bq/scale into the key side (runs once).
# --------------------------------------------------------------------------
def kv_project_kernel(k_ref, v_ref, wk_ref, bk_ref, wv_ref, bv_ref,
                      wqs_ref, bqs_ref, wp_ref, bp_ref, vp_ref):
    bf16 = jnp.bfloat16
    k = k_ref[...].astype(bf16)
    v = v_ref[...].astype(bf16)

    # K/V projections: bf16 MXU operands, f32 accumulation, f32 bias add.
    kp = jnp.dot(k, wk_ref[...].astype(bf16),
                 preferred_element_type=jnp.float32) + bk_ref[...]
    vp = jnp.dot(v, wv_ref[...].astype(bf16),
                 preferred_element_type=jnp.float32) + bv_ref[...]

    # Fold scaled query projection into the key side:
    #   W'_tile = (Wq*s) @ kp_tile^T  (D, tk),  b'_tile = (bq*s) @ kp_tile^T.
    kp_b = kp.astype(bf16)
    wqs = wqs_ref[...].astype(bf16)
    bqs = bqs_ref[...].astype(bf16)
    wp = lax.dot_general(wqs, kp_b, dimension_numbers=(((1,), (1,)), ((), ())),
                         preferred_element_type=jnp.float32)
    bp = lax.dot_general(bqs, kp_b, dimension_numbers=(((1,), (1,)), ((), ())),
                         preferred_element_type=jnp.float32)

    wp_ref[...] = wp.astype(wp_ref.dtype)   # bf16
    bp_ref[...] = bp.astype(bp_ref.dtype)   # f32
    vp_ref[...] = vp.astype(vp_ref.dtype)   # bf16


def project_and_fold(key, value, wq_s, bq_s, wk, bk, wv, bv, *, tk=512):
    Nk, D = key.shape
    tk = min(tk, Nk)
    assert Nk % tk == 0
    assert tk == Nk or (tk % 128 == 0)   # (8,128) tiling of the W'/b' blocks
    full = lambda i: (0, 0)

    est = (2 * 2 * tk * D * 4                      # key/value tiles (2 bufs)
           + 3 * D * D * 4 + 4 * D * 4             # weights + biases
           + 2 * (D * tk * 2 + tk * 4 + tk * D * 2)  # outputs (2 bufs)
           + 8 * tk * D * 4)                       # in-kernel intermediates

    grid_spec = pltpu.PrefetchScalarGridSpec(
        num_scalar_prefetch=0,
        grid=(Nk // tk,),
        in_specs=[
            pl.BlockSpec((tk, D), lambda i: (i, 0)),   # key tile
            pl.BlockSpec((tk, D), lambda i: (i, 0)),   # value tile
            pl.BlockSpec((D, D), full),                # Wk^T
            pl.BlockSpec((1, D), full),                # bk
            pl.BlockSpec((D, D), full),                # Wv^T
            pl.BlockSpec((1, D), full),                # bv
            pl.BlockSpec((D, D), full),                # Wq^T * scale
            pl.BlockSpec((1, D), full),                # bq * scale
        ],
        out_specs=[
            pl.BlockSpec((D, tk), lambda i: (0, i)),   # W'
            pl.BlockSpec((1, tk), lambda i: (0, i)),   # b'
            pl.BlockSpec((tk, D), lambda i: (i, 0)),   # V'
        ],
    )
    return pl.pallas_call(
        kv_project_kernel,
        out_shape=(
            jax.ShapeDtypeStruct((D, Nk), jnp.bfloat16),
            jax.ShapeDtypeStruct((1, Nk), jnp.float32),
            jax.ShapeDtypeStruct((Nk, D), jnp.bfloat16),
        ),
        grid_spec=grid_spec,
        compiler_params=pltpu.CompilerParams(
            dimension_semantics=("parallel",),
            vmem_limit_bytes=_vmem_limit(est),
        ),
    )(key, value, wk, bk.reshape(1, D), wv, bv.reshape(1, D), wq_s, bq_s)


# --------------------------------------------------------------------------
# Kernel 2: per query-tile attention + LayerNorm.
# --------------------------------------------------------------------------
def cross_attention_kernel(q_ref, wp_ref, bp_ref, vp_ref,
                           gamma_ref, beta_ref, o_ref):
    # scores = q @ W' + b'  (scale + query projection already folded in).
    q = q_ref[...].astype(jnp.bfloat16)                                  # (tq, D)
    scores = jnp.dot(q, wp_ref[...],
                     preferred_element_type=jnp.float32) + bp_ref[...]   # (tq, Nk)

    # Numerically stable softmax (f32); denominator reciprocal on the EUP.
    scores = scores - jnp.max(scores, axis=-1, keepdims=True)
    p = jnp.exp(scores)
    p = p * pl.reciprocal(jnp.sum(p, axis=-1, keepdims=True), approx=True)

    # Attend with bf16 MXU operands, f32 accumulation.
    attended = jnp.dot(p.astype(jnp.bfloat16), vp_ref[...],
                       preferred_element_type=jnp.float32)               # (tq, D)

    # LayerNorm over the feature dim (f32).
    mean = jnp.mean(attended, axis=-1, keepdims=True)
    centered = attended - mean
    var = jnp.mean(centered * centered, axis=-1, keepdims=True)
    out = centered * lax.rsqrt(var + LN_EPS) * gamma_ref[...] + beta_ref[...]

    o_ref[...] = out.astype(o_ref.dtype)


def cross_attention(query, key, value, params, *, tq=256, tk=512):
    """query: [Nq, D], key/value: [Nk, D].  Returns [Nq, D]."""
    Nq, D = query.shape
    Nk, _ = key.shape
    tq = min(tq, Nq)
    assert Nq % tq == 0 and tq % 8 == 0
    assert key.shape[1] == D and value.shape == key.shape

    wq, bq, wk, bk, wv, bv, gamma, beta = params
    scale = 1.0 / (D ** 0.5)
    wq_s = wq * scale                       # fold attention scale into Wq / bq
    bq_s = (bq * scale).reshape(1, D)
    g2 = gamma.reshape(1, D)
    be2 = beta.reshape(1, D)

    # One-time pass: V' plus folded W'/b' (kept as a separate launch so the
    # Nq axis below can stay "parallel" for v7x megacore sharding).
    w_prime, b_prime, v_proj = project_and_fold(
        key, value, wq_s, bq_s, wk, bk, wv, bv, tk=tk)

    est = (2 * 2 * tq * D * 4                                    # q + out tiles
           + 2 * (D * Nk * 2 + Nk * 4 + Nk * D * 2 + 4 * D * 4)  # invariants
           + 6 * tq * Nk * 4)                                    # scores/probs
    vmem = _vmem_limit(est)

    def launch(single_buffer):
        def inv(shape):
            # Grid-invariant operand: single-buffer when supported (halves the
            # resident VMEM for W'/V' — matters on v7x's 64 MiB VMEM).
            if single_buffer:
                return pl.BlockSpec(shape, lambda i: (0, 0),
                                    pipeline_mode=pl.Buffered(1))
            return pl.BlockSpec(shape, lambda i: (0, 0))

        grid_spec = pltpu.PrefetchScalarGridSpec(
            num_scalar_prefetch=0,
            grid=(Nq // tq,),
            in_specs=[
                pl.BlockSpec((tq, D), lambda i: (i, 0)),   # query tile
                inv((D, Nk)),                              # W' (bf16, resident)
                inv((1, Nk)),                              # b'
                inv((Nk, D)),                              # V' (bf16, resident)
                inv((1, D)),                               # LN gamma
                inv((1, D)),                               # LN beta
            ],
            out_specs=pl.BlockSpec((tq, D), lambda i: (i, 0)),
        )
        return pl.pallas_call(
            cross_attention_kernel,
            out_shape=jax.ShapeDtypeStruct((Nq, D), query.dtype),
            grid_spec=grid_spec,
            compiler_params=pltpu.CompilerParams(
                dimension_semantics=("parallel",),
                vmem_limit_bytes=vmem,
            ),
        )(query, w_prime, b_prime, v_proj, g2, be2)

    try:
        return launch(single_buffer=True)
    except Exception:
        # pipeline_mode=pl.Buffered(1) unsupported in this jax build; fall back
        # to the default double-buffered invariant inputs (correct, more VMEM).
        return launch(single_buffer=False)


# --------------------------------------------------------------------------
# Pure-JAX references.
# --------------------------------------------------------------------------
def cross_attention_ref(query, key, value, params, *, match_kernel_bf16=False):
    """match_kernel_bf16=False: straight f32 PyTorch-equivalent math.
       match_kernel_bf16=True: same math with bf16 casts at the kernel's cast
       points (tight comparison target for the bf16 kernel)."""
    wq, bq, wk, bk, wv, bv, gamma, beta = params
    D = query.shape[-1]
    scale = 1.0 / D ** 0.5

    if not match_kernel_bf16:
        qp = query @ wq + bq
        kp = key @ wk + bk
        vp = value @ wv + bv
        scores = (qp @ kp.T) * scale
        att = jax.nn.softmax(scores, axis=-1) @ vp
    else:
        bf = lambda x: x.astype(jnp.bfloat16)
        dot = lambda a, b: jnp.dot(a, b, preferred_element_type=jnp.float32)
        dgt = lambda a, b: lax.dot_general(            # contract last dims
            a, b, dimension_numbers=(((1,), (1,)), ((), ())),
            preferred_element_type=jnp.float32)
        kp = dot(bf(key), bf(wk)) + bk
        vp = (dot(bf(value), bf(wv)) + bv).astype(jnp.bfloat16)
        kp_b = bf(kp)
        wp = dgt(bf(wq * scale), kp_b).astype(jnp.bfloat16)
        bp = dgt(bf((bq * scale).reshape(1, D)), kp_b)
        scores = dot(bf(query), wp) + bp
        p = jax.nn.softmax(scores, axis=-1).astype(jnp.bfloat16)
        att = dot(p, vp)

    mean = att.mean(-1, keepdims=True)
    var = ((att - mean) ** 2).mean(-1, keepdims=True)
    return (att - mean) / jnp.sqrt(var + LN_EPS) * gamma + beta


def init_params(key, emb_dim=EMB_DIM):
    """Deterministic synthetic parameters (shapes match nn.Linear / LayerNorm);
    Linear weights stored pre-transposed: [in, out]."""
    ks = jax.random.split(key, 6)
    bound = 1.0 / (emb_dim ** 0.5)
    wq = jax.random.uniform(ks[0], (emb_dim, emb_dim), jnp.float32, -bound, bound)
    bq = jax.random.uniform(ks[1], (emb_dim,), jnp.float32, -bound, bound)
    wk = jax.random.uniform(ks[2], (emb_dim, emb_dim), jnp.float32, -bound, bound)
    bk = jax.random.uniform(ks[3], (emb_dim,), jnp.float32, -bound, bound)
    wv = jax.random.uniform(ks[4], (emb_dim, emb_dim), jnp.float32, -bound, bound)
    bv = jax.random.uniform(ks[5], (emb_dim,), jnp.float32, -bound, bound)
    gamma = jnp.ones((emb_dim,), jnp.float32)
    beta = jnp.zeros((emb_dim,), jnp.float32)
    return (wq, bq, wk, bk, wv, bv, gamma, beta)


if __name__ == "__main__":
    rng = jax.random.PRNGKey(0)
    kq, kk, kv_, kp_ = jax.random.split(rng, 4)

    Nq, Nk, D = 256, 256, EMB_DIM
    query = jax.random.normal(kq, (Nq, D), jnp.float32)
    key_in = jax.random.normal(kk, (Nk, D), jnp.float32)
    value = jax.random.normal(kv_, (Nk, D), jnp.float32)
    params = init_params(kp_, D)

    # tq=128 keeps >=2 grid steps on the Nq axis (both v7x TensorCores busy).
    out = cross_attention(query, key_in, value, params, tq=128)
    out = jax.block_until_ready(out)
    assert out.shape == (Nq, D)

    # Tight check against a reference with matching bf16 cast points, plus a
    # loose structural sanity check against the pure-f32 PyTorch-equivalent
    # math (LayerNorm amplifies bf16 operand rounding by ~1/std(attended)).
    ref_bf16 = cross_attention_ref(query, key_in, value, params,
                                   match_kernel_bf16=True)
    ref_f32 = cross_attention_ref(query, key_in, value, params,
                                  match_kernel_bf16=False)
    err_matched = float(jnp.max(jnp.abs(out - ref_bf16)))
    err_f32 = float(jnp.max(jnp.abs(out - ref_f32)))
    assert err_matched < 3e-2, (err_matched, err_f32)
    assert err_f32 < 3e-1, (err_matched, err_f32)
    print("KERNEL_OK")
</pallas_src>

<mosaic_0001>
module attributes {stable_mosaic.version = 11 : i64} {
  func.func @kv_project_kernel(%arg0: i32, %arg1: memref<256x64xf32, #tpu.memory_space<vmem>>, %arg2: memref<256x64xf32, #tpu.memory_space<vmem>>, %arg3: memref<64x64xf32, #tpu.memory_space<vmem>>, %arg4: memref<1x64xf32, #tpu.memory_space<vmem>>, %arg5: memref<64x64xf32, #tpu.memory_space<vmem>>, %arg6: memref<1x64xf32, #tpu.memory_space<vmem>>, %arg7: memref<64x64xf32, #tpu.memory_space<vmem>>, %arg8: memref<1x64xf32, #tpu.memory_space<vmem>>, %arg9: memref<64x256xbf16, #tpu.memory_space<vmem>>, %arg10: memref<1x256xf32, #tpu.memory_space<vmem>>, %arg11: memref<256x64xbf16, #tpu.memory_space<vmem>>) attributes {dimension_semantics = [#tpu.dimension_semantics<parallel>], iteration_bounds = array<i64: 1>, scalar_prefetch = 0 : i64, scratch_operands = 0 : i64, tpu.core_type = #tpu.core_type<tc>, window_params = [{transform_indices = @transform_0, window_bounds = array<i64: 256, 64>}, {transform_indices = @transform_1, window_bounds = array<i64: 256, 64>}, {pipeline_mode = #tpu.pipeline_mode<synchronous>, transform_indices = @transform_2, window_bounds = array<i64: 64, 64>}, {pipeline_mode = #tpu.pipeline_mode<synchronous>, transform_indices = @transform_3, window_bounds = array<i64: 1, 64>}, {pipeline_mode = #tpu.pipeline_mode<synchronous>, transform_indices = @transform_4, window_bounds = array<i64: 64, 64>}, {pipeline_mode = #tpu.pipeline_mode<synchronous>, transform_indices = @transform_5, window_bounds = array<i64: 1, 64>}, {pipeline_mode = #tpu.pipeline_mode<synchronous>, transform_indices = @transform_6, window_bounds = array<i64: 64, 64>}, {pipeline_mode = #tpu.pipeline_mode<synchronous>, transform_indices = @transform_7, window_bounds = array<i64: 1, 64>}, {transform_indices = @transform_8, window_bounds = array<i64: 64, 256>}, {transform_indices = @transform_9, window_bounds = array<i64: 1, 256>}, {transform_indices = @transform_10, window_bounds = array<i64: 256, 64>}]} {
    %c0 = arith.constant 0 : index
    %c0_0 = arith.constant 0 : index
    %0 = vector.load %arg1[%c0, %c0_0] : memref<256x64xf32, #tpu.memory_space<vmem>>, vector<256x64xf32>
    %1 = arith.truncf %0 : vector<256x64xf32> to vector<256x64xbf16>
    %c0_1 = arith.constant 0 : index
    %c0_2 = arith.constant 0 : index
    %2 = vector.load %arg2[%c0_1, %c0_2] : memref<256x64xf32, #tpu.memory_space<vmem>>, vector<256x64xf32>
    %3 = arith.truncf %2 : vector<256x64xf32> to vector<256x64xbf16>
    %c0_3 = arith.constant 0 : index
    %c0_4 = arith.constant 0 : index
    %4 = vector.load %arg3[%c0_3, %c0_4] : memref<64x64xf32, #tpu.memory_space<vmem>>, vector<64x64xf32>
    %5 = arith.truncf %4 : vector<64x64xf32> to vector<64x64xbf16>
    %cst = arith.constant dense<0.000000e+00> : vector<256x64xf32>
    %6 = tpu.matmul %1, %5, %cst {dimension_numbers = #tpu.dot_dimension_numbers<[1], [0], [0], [1], [0, 0, 1, 1], [], []>} : vector<256x64xbf16>, vector<64x64xbf16>, vector<256x64xf32> -> vector<256x64xf32>
    %c0_5 = arith.constant 0 : index
    %c0_6 = arith.constant 0 : index
    %7 = vector.load %arg4[%c0_5, %c0_6] : memref<1x64xf32, #tpu.memory_space<vmem>>, vector<1x64xf32>
    %8 = vector.broadcast %7 : vector<1x64xf32> to vector<256x64xf32>
    %9 = arith.addf %6, %8 : vector<256x64xf32>
    %c0_7 = arith.constant 0 : index
    %c0_8 = arith.constant 0 : index
    %10 = vector.load %arg5[%c0_7, %c0_8] : memref<64x64xf32, #tpu.memory_space<vmem>>, vector<64x64xf32>
    %11 = arith.truncf %10 : vector<64x64xf32> to vector<64x64xbf16>
    %cst_9 = arith.constant dense<0.000000e+00> : vector<256x64xf32>
    %12 = tpu.matmul %3, %11, %cst_9 {dimension_numbers = #tpu.dot_dimension_numbers<[1], [0], [0], [1], [0, 0, 1, 1], [], []>} : vector<256x64xbf16>, vector<64x64xbf16>, vector<256x64xf32> -> vector<256x64xf32>
    %c0_10 = arith.constant 0 : index
    %c0_11 = arith.constant 0 : index
    %13 = vector.load %arg6[%c0_10, %c0_11] : memref<1x64xf32, #tpu.memory_space<vmem>>, vector<1x64xf32>
    %14 = vector.broadcast %13 : vector<1x64xf32> to vector<256x64xf32>
    %15 = arith.addf %12, %14 : vector<256x64xf32>
    %16 = arith.truncf %9 : vector<256x64xf32> to vector<256x64xbf16>
    %c0_12 = arith.constant 0 : index
    %c0_13 = arith.constant 0 : index
    %17 = vector.load %arg7[%c0_12, %c0_13] : memref<64x64xf32, #tpu.memory_space<vmem>>, vector<64x64xf32>
    %18 = arith.truncf %17 : vector<64x64xf32> to vector<64x64xbf16>
    %c0_14 = arith.constant 0 : index
    %c0_15 = arith.constant 0 : index
    %19 = vector.load %arg8[%c0_14, %c0_15] : memref<1x64xf32, #tpu.memory_space<vmem>>, vector<1x64xf32>
    %20 = arith.truncf %19 : vector<1x64xf32> to vector<1x64xbf16>
    %cst_16 = arith.constant dense<0.000000e+00> : vector<64x256xf32>
    %21 = tpu.matmul %18, %16, %cst_16 {dimension_numbers = #tpu.dot_dimension_numbers<[1], [1], [0], [0], [0, 0, 1, 0], [], []>} : vector<64x64xbf16>, vector<256x64xbf16>, vector<64x256xf32> -> vector<64x256xf32>
    %cst_17 = arith.constant dense<0.000000e+00> : vector<1x256xf32>
    %22 = tpu.matmul %20, %16, %cst_17 {dimension_numbers = #tpu.dot_dimension_numbers<[1], [1], [0], [0], [0, 0, 1, 0], [], []>} : vector<1x64xbf16>, vector<256x64xbf16>, vector<1x256xf32> -> vector<1x256xf32>
    %23 = arith.truncf %21 : vector<64x256xf32> to vector<64x256xbf16>
    %c0_18 = arith.constant 0 : index
    %c0_19 = arith.constant 0 : index
    %24 = vector.load %arg9[%c0_18, %c0_19] : memref<64x256xbf16, #tpu.memory_space<vmem>>, vector<64x256xbf16>
    tpu.vector_store %arg9[%c0_18, %c0_19], %23 {strides = array<i32>} : memref<64x256xbf16, #tpu.memory_space<vmem>>, vector<64x256xbf16>,
    %c0_20 = arith.constant 0 : index
    %c0_21 = arith.constant 0 : index
    %25 = vector.load %arg10[%c0_20, %c0_21] : memref<1x256xf32, #tpu.memory_space<vmem>>, vector<1x256xf32>
    tpu.vector_store %arg10[%c0_20, %c0_21], %22 {strides = array<i32>} : memref<1x256xf32, #tpu.memory_space<vmem>>, vector<1x256xf32>,
    %26 = arith.truncf %15 : vector<256x64xf32> to vector<256x64xbf16>
    %c0_22 = arith.constant 0 : index
    %c0_23 = arith.constant 0 : index
    %27 = vector.load %arg11[%c0_22, %c0_23] : memref<256x64xbf16, #tpu.memory_space<vmem>>, vector<256x64xbf16>
    tpu.vector_store %arg11[%c0_22, %c0_23], %26 {strides = array<i32>} : memref<256x64xbf16, #tpu.memory_space<vmem>>, vector<256x64xbf16>,
    return
  }
  func.func @transform_0(%arg0: i32) -> (i32, i32) {
    %c0_i32 = arith.constant 0 : i32
    %c0_i32_0 = arith.constant 0 : i32
    return %arg0, %c0_i32 : i32, i32
  }
  func.func @transform_1(%arg0: i32) -> (i32, i32) {
    %c0_i32 = arith.constant 0 : i32
    %c0_i32_0 = arith.constant 0 : i32
    return %arg0, %c0_i32 : i32, i32
  }
  func.func @transform_2(%arg0: i32) -> (i32, i32) {
    %c0_i32 = arith.constant 0 : i32
    %c0_i32_0 = arith.constant 0 : i32
    %c0_i32_1 = arith.constant 0 : i32
    return %c0_i32, %c0_i32_0 : i32, i32
  }
  func.func @transform_3(%arg0: i32) -> (i32, i32) {
    %c0_i32 = arith.constant 0 : i32
    %c0_i32_0 = arith.constant 0 : i32
    %c0_i32_1 = arith.constant 0 : i32
    return %c0_i32, %c0_i32_0 : i32, i32
  }
  func.func @transform_4(%arg0: i32) -> (i32, i32) {
    %c0_i32 = arith.constant 0 : i32
    %c0_i32_0 = arith.constant 0 : i32
    %c0_i32_1 = arith.constant 0 : i32
    return %c0_i32, %c0_i32_0 : i32, i32
  }
  func.func @transform_5(%arg0: i32) -> (i32, i32) {
    %c0_i32 = arith.constant 0 : i32
    %c0_i32_0 = arith.constant 0 : i32
    %c0_i32_1 = arith.constant 0 : i32
    return %c0_i32, %c0_i32_0 : i32, i32
  }
  func.func @transform_6(%arg0: i32) -> (i32, i32) {
    %c0_i32 = arith.constant 0 : i32
    %c0_i32_0 = arith.constant 0 : i32
    %c0_i32_1 = arith.constant 0 : i32
    return %c0_i32, %c0_i32_0 : i32, i32
  }
  func.func @transform_7(%arg0: i32) -> (i32, i32) {
    %c0_i32 = arith.constant 0 : i32
    %c0_i32_0 = arith.constant 0 : i32
    %c0_i32_1 = arith.constant 0 : i32
    return %c0_i32, %c0_i32_0 : i32, i32
  }
  func.func @transform_8(%arg0: i32) -> (i32, i32) {
    %c0_i32 = arith.constant 0 : i32
    %c0_i32_0 = arith.constant 0 : i32
    return %c0_i32, %arg0 : i32, i32
  }
  func.func @transform_9(%arg0: i32) -> (i32, i32) {
    %c0_i32 = arith.constant 0 : i32
    %c0_i32_0 = arith.constant 0 : i32
    return %c0_i32, %arg0 : i32, i32
  }
  func.func @transform_10(%arg0: i32) -> (i32, i32) {
    %c0_i32 = arith.constant 0 : i32
    %c0_i32_0 = arith.constant 0 : i32
    return %arg0, %c0_i32 : i32, i32
  }
}

</mosaic_0001>

<llo_original>
// kernel: tpu_custom_call.1
$region0: #{tpu_custom_call.1}
  #allocation0 [shape = 'u32[]', space=smem, size = 0x4, offset = 0x4, fixed_abs, tag = 'smem constant byte address 0x4 - core index']
  #allocation1 [shape = 'u32[72,128]{1,0:T(1,128)}', space=vmem, size = 0x9000, scoped, tag = 'internal scratch']
  %s0 = inlined_call_operand.vmem [shape: f32[256,64], index: 0, kind: input, shape index: {}]
  %s1 = inlined_call_operand.vmem [shape: f32[256,64], index: 1, kind: input, shape index: {}]
  %s2 = inlined_call_operand.vmem [shape: f32[64,64], index: 2, kind: input, shape index: {}]
  %s3 = inlined_call_operand.vmem [shape: f32[1,64], index: 3, kind: input, shape index: {}]
  %s4 = inlined_call_operand.vmem [shape: f32[64,64], index: 4, kind: input, shape index: {}]
  %s5 = inlined_call_operand.vmem [shape: f32[1,64], index: 5, kind: input, shape index: {}]
  %s6 = inlined_call_operand.vmem [shape: f32[64,64], index: 6, kind: input, shape index: {}]
  %s7 = inlined_call_operand.vmem [shape: f32[1,64], index: 7, kind: input, shape index: {}]
  %s8 = inlined_call_operand.hbm [shape: bf16[64,256], index: 8, kind: output, shape index: {0}]
  %s9 = inlined_call_operand.hbm [shape: f32[1,256], index: 9, kind: output, shape index: {1}]
  %s10 = inlined_call_operand.vmem [shape: bf16[256,64], index: 10, kind: output, shape index: {2}]
  %11 = xla_tuple %s8, %s9, %s10
  %s12 = sld [smem:[#allocation0]]
  $region58: #{tpu_custom_call.1} parent=0
    _
  %s14 = ssub.s32 1, %s12
  %s15 = scalar_select 0, %s14, %s12
  $region1: #{tpu_custom_call.1} parent=0
    #allocation2 [shape = 'u8[32768]{0}', space=vmem, size = 0x8000, scoped, tag = 'output window, operand 0, single buffered']
    #allocation3 [shape = 's32[1]{0}', space=sflag, size = 0x4, scoped, tag = 'scoped memory for tpu_custom_call.1']
    #allocation4 [shape = 'u8[1024]{0}', space=vmem, size = 0x400, scoped, tag = 'output window, operand 1, single buffered']
    #allocation5 [shape = 's32[1]{0}', space=sflag, size = 0x4, scoped, tag = 'scoped memory for tpu_custom_call.1']
    %16 = vsyncpa [#allocation3], 0
    %17 = vsyncpa [#allocation5], 0
    // Predicated region
    $region2: #{tpu_custom_call.1} parent=1 // pred_check
      _
    $region3: #{tpu_custom_call.1} parent=1 // pred_check_branch
      %19 = sbr.rel (0) target = $region5
    $region4: #{tpu_custom_call.1} parent=1 // pred_region
      _
    $region5: #{tpu_custom_call.1} parent=1 // pred_fallthru
      _
    // Predicated region
    $region6: #{tpu_custom_call.1} parent=1 // pred_check
      _
    $region7: #{tpu_custom_call.1} parent=1 // pred_check_branch
      %21 = sbr.rel (0) target = $region9
    $region8: #{tpu_custom_call.1} parent=1 // pred_region
      _
    $region9: #{tpu_custom_call.1} parent=1 // pred_fallthru
      _
    // Predicated region
    $region10: #{tpu_custom_call.1} parent=1 // pred_check
      _
    $region11: #{tpu_custom_call.1} parent=1 // pred_check_branch
      %23 = sbr.rel (0) target = $region13
    $region12: #{tpu_custom_call.1} parent=1 // pred_region
      _
    $region13: #{tpu_custom_call.1} parent=1 // pred_fallthru
      _
    // Predicated region
    $region14: #{tpu_custom_call.1} parent=1 // pred_check
      _
    $region15: #{tpu_custom_call.1} parent=1 // pred_check_branch
      %25 = sbr.rel (0) target = $region17
    $region16: #{tpu_custom_call.1} parent=1 // pred_region
      _
    $region17: #{tpu_custom_call.1} parent=1 // pred_fallthru
      _
    // Predicated region
    $region18: #{tpu_custom_call.1} parent=1 // pred_check
      _
    $region19: #{tpu_custom_call.1} parent=1 // pred_check_branch
      %27 = sbr.rel (0) target = $region21
    $region20: #{tpu_custom_call.1} parent=1 // pred_region
      _
    $region21: #{tpu_custom_call.1} parent=1 // pred_fallthru
      _
    // Predicated region
    $region22: #{tpu_custom_call.1} parent=1 // pred_check
      _
    $region23: #{tpu_custom_call.1} parent=1 // pred_check_branch
      %29 = sbr.rel (0) target = $region25
    $region24: #{tpu_custom_call.1} parent=1 // pred_region
      _
    $region25: #{tpu_custom_call.1} parent=1 // pred_fallthru
      _
    // Predicated region
    $region26: #{tpu_custom_call.1} parent=1 // pred_check
      _
    $region27: #{tpu_custom_call.1} parent=1 // pred_check_branch
      %31 = sbr.rel (0) target = $region29
    $region28: #{tpu_custom_call.1} parent=1 // pred_region
      _
    $region29: #{tpu_custom_call.1} parent=1 // pred_fallthru
      _
    // Predicated region
    $region30: #{tpu_custom_call.1} parent=1 // pred_check
      _
    $region31: #{tpu_custom_call.1} parent=1 // pred_check_branch
      %33 = sbr.rel (0) target = $region33
    $region32: #{tpu_custom_call.1} parent=1 // pred_region
      _
    $region33: #{tpu_custom_call.1} parent=1 // pred_fallthru
      _
    %v35 = vld [vmem:[%s0] sm:$0xff]
    %v36 = vld [vmem:[%s0 + $0x8] sm:$0xff]
    %v37 = vld [vmem:[%s0 + $0x10] sm:$0xff]
    %v38 = vld [vmem:[%s0 + $0x18] sm:$0xff]
    %v39 = vld [vmem:[%s0 + $0x20] sm:$0xff]
    %v40 = vld [vmem:[%s0 + $0x28] sm:$0xff]
    %v41 = vld [vmem:[%s0 + $0x30] sm:$0xff]
    %v42 = vld [vmem:[%s0 + $0x38] sm:$0xff]
    %v43 = vld [vmem:[%s0 + $0x40] sm:$0xff]
    %v44 = vld [vmem:[%s0 + $0x48] sm:$0xff]
    %v45 = vld [vmem:[%s0 + $0x50] sm:$0xff]
    %v46 = vld [vmem:[%s0 + $0x58] sm:$0xff]
    %v47 = vld [vmem:[%s0 + $0x60] sm:$0xff]
    %v48 = vld [vmem:[%s0 + $0x68] sm:$0xff]
    %v49 = vld [vmem:[%s0 + $0x70] sm:$0xff]
    %v50 = vld [vmem:[%s0 + $0x78] sm:$0xff]
    %v51 = vld [vmem:[%s0 + $0x80] sm:$0xff]
    %v52 = vld [vmem:[%s0 + $0x88] sm:$0xff]
    %v53 = vld [vmem:[%s0 + $0x90] sm:$0xff]
    %v54 = vld [vmem:[%s0 + $0x98] sm:$0xff]
    %v55 = vld [vmem:[%s0 + $0xa0] sm:$0xff]
    %v56 = vld [vmem:[%s0 + $0xa8] sm:$0xff]
    %v57 = vld [vmem:[%s0 + $0xb0] sm:$0xff]
    %v58 = vld [vmem:[%s0 + $0xb8] sm:$0xff]
    %v59 = vld [vmem:[%s0 + $0xc0] sm:$0xff]
    %v60 = vld [vmem:[%s0 + $0xc8] sm:$0xff]
    %v61 = vld [vmem:[%s0 + $0xd0] sm:$0xff]
    %v62 = vld [vmem:[%s0 + $0xd8] sm:$0xff]
    %v63 = vld [vmem:[%s0 + $0xe0] sm:$0xff]
    %v64 = vld [vmem:[%s0 + $0xe8] sm:$0xff]
    %v65 = vld [vmem:[%s0 + $0xf0] sm:$0xff]
    %v66 = vld [vmem:[%s0 + $0xf8] sm:$0xff]
    %v67 = vpack.c.bf16 %v36, %v35
    %v68 = vpack.c.bf16 %v38, %v37
    %v69 = vpack.c.bf16 %v40, %v39
    %v70 = vpack.c.bf16 %v42, %v41
    %v71 = vpack.c.bf16 %v44, %v43
    %v72 = vpack.c.bf16 %v46, %v45
    %v73 = vpack.c.bf16 %v48, %v47
    %v74 = vpack.c.bf16 %v50, %v49
    %v75 = vpack.c.bf16 %v52, %v51
    %v76 = vpack.c.bf16 %v54, %v53
    %v77 = vpack.c.bf16 %v56, %v55
    %v78 = vpack.c.bf16 %v58, %v57
    %v79 = vpack.c.bf16 %v60, %v59
    %v80 = vpack.c.bf16 %v62, %v61
    %v81 = vpack.c.bf16 %v64, %v63
    %v82 = vpack.c.bf16 %v66, %v65
    %v83 = vld [vmem:[%s1] sm:$0xff]
    %v84 = vld [vmem:[%s1 + $0x8] sm:$0xff]
    %v85 = vld [vmem:[%s1 + $0x10] sm:$0xff]
    %v86 = vld [vmem:[%s1 + $0x18] sm:$0xff]
    %v87 = vld [vmem:[%s1 + $0x20] sm:$0xff]
    %v88 = vld [vmem:[%s1 + $0x28] sm:$0xff]
    %v89 = vld [vmem:[%s1 + $0x30] sm:$0xff]
    %v90 = vld [vmem:[%s1 + $0x38] sm:$0xff]
    %v91 = vld [vmem:[%s1 + $0x40] sm:$0xff]
    %v92 = vld [vmem:[%s1 + $0x48] sm:$0xff]
    %v93 = vld [vmem:[%s1 + $0x50] sm:$0xff]
    %v94 = vld [vmem:[%s1 + $0x58] sm:$0xff]
    %v95 = vld [vmem:[%s1 + $0x60] sm:$0xff]
    %v96 = vld [vmem:[%s1 + $0x68] sm:$0xff]
    %v97 = vld [vmem:[%s1 + $0x70] sm:$0xff]
    %v98 = vld [vmem:[%s1 + $0x78] sm:$0xff]
    %v99 = vld [vmem:[%s1 + $0x80] sm:$0xff]
    %v100 = vld [vmem:[%s1 + $0x88] sm:$0xff]
    %v101 = vld [vmem:[%s1 + $0x90] sm:$0xff]
    %v102 = vld [vmem:[%s1 + $0x98] sm:$0xff]
    %v103 = vld [vmem:[%s1 + $0xa0] sm:$0xff]
    %v104 = vld [vmem:[%s1 + $0xa8] sm:$0xff]
    %v105 = vld [vmem:[%s1 + $0xb0] sm:$0xff]
    %v106 = vld [vmem:[%s1 + $0xb8] sm:$0xff]
    %v107 = vld [vmem:[%s1 + $0xc0] sm:$0xff]
    %v108 = vld [vmem:[%s1 + $0xc8] sm:$0xff]
    %v109 = vld [vmem:[%s1 + $0xd0] sm:$0xff]
    %v110 = vld [vmem:[%s1 + $0xd8] sm:$0xff]
    %v111 = vld [vmem:[%s1 + $0xe0] sm:$0xff]
    %v112 = vld [vmem:[%s1 + $0xe8] sm:$0xff]
    %v113 = vld [vmem:[%s1 + $0xf0] sm:$0xff]
    %v114 = vld [vmem:[%s1 + $0xf8] sm:$0xff]
    %v115 = vpack.c.bf16 %v84, %v83
    %v116 = vpack.c.bf16 %v86, %v85
    %v117 = vpack.c.bf16 %v88, %v87
    %v118 = vpack.c.bf16 %v90, %v89
    %v119 = vpack.c.bf16 %v92, %v91
    %v120 = vpack.c.bf16 %v94, %v93
    %v121 = vpack.c.bf16 %v96, %v95
    %v122 = vpack.c.bf16 %v98, %v97
    %v123 = vpack.c.bf16 %v100, %v99
    %v124 = vpack.c.bf16 %v102, %v101
    %v125 = vpack.c.bf16 %v104, %v103
    %v126 = vpack.c.bf16 %v106, %v105
    %v127 = vpack.c.bf16 %v108, %v107
    %v128 = vpack.c.bf16 %v110, %v109
    %v129 = vpack.c.bf16 %v112, %v111
    %v130 = vpack.c.bf16 %v114, %v113
    %v131 = vld [vmem:[%s2] sm:$0xff]
    %v132 = vld [vmem:[%s2 + $0x8] sm:$0xff]
    %v133 = vld [vmem:[%s2 + $0x10] sm:$0xff]
    %v134 = vld [vmem:[%s2 + $0x18] sm:$0xff]
    %v135 = vld [vmem:[%s2 + $0x20] sm:$0xff]
    %v136 = vld [vmem:[%s2 + $0x28] sm:$0xff]
    %v137 = vld [vmem:[%s2 + $0x30] sm:$0xff]
    %v138 = vld [vmem:[%s2 + $0x38] sm:$0xff]
    %v139 = vpack.c.bf16 %v132, %v131
    %v140 = vpack.c.bf16 %v134, %v133
    %v141 = vpack.c.bf16 %v136, %v135
    %v142 = vpack.c.bf16 %v138, %v137
    %v143 = vld [vmem:[%s3] sm:$0x1]
    %v145 = vperm.slane %v143, 0
    %vm147 = vcmask 523264
    %v149 = vsel %vm147, %v67, 0
    %v152 = vsel %vm147, %v68, 0
    %v155 = vsel %vm147, %v69, 0
    %v158 = vsel %vm147, %v70, 0
    %v161 = vsel %vm147, %v71, 0
    %v164 = vsel %vm147, %v72, 0
    %v167 = vsel %vm147, %v73, 0
    %v170 = vsel %vm147, %v74, 0
    %v173 = vsel %vm147, %v75, 0
    %v176 = vsel %vm147, %v76, 0
    %v179 = vsel %vm147, %v77, 0
    %v182 = vsel %vm147, %v78, 0
    %v185 = vsel %vm147, %v79, 0
    %v188 = vsel %vm147, %v80, 0
    %v191 = vsel %vm147, %v81, 0
    %v194 = vsel %vm147, %v82, 0
    %196 = vmatpush.bf16.msra.mxu0 0
    %197 = vmatpush.bf16.msra.mxu0 0
    %198 = vmatpush.bf16.msra.mxu0 0
    %199 = vmatpush.bf16.msra.mxu0 0
    %200 = vmatpush.bf16.msra.mxu0 %v142
    %201 = vmatpush.bf16.msra.mxu0 %v141
    %202 = vmatpush.bf16.msra.mxu0 %v140
    %203 = vmatpush.bf16.msra.mxu0 %v139
    %204 = vmatmul.bf16.gmra.mxu0 %v149
    %v205 = vpop.f32.mrf.mxu0
    %v206 = vadd.f32 %v145, %v205
    %v207 = vpop.f32.mrf.mxu0
    %v208 = vadd.f32 %v145, %v207
    %209 = vmatmul.bf16.gmra.mxu0 %v152
    %v210 = vpop.f32.mrf.mxu0
    %v211 = vadd.f32 %v145, %v210
    %v212 = vpop.f32.mrf.mxu0
    %v213 = vadd.f32 %v145, %v212
    %214 = vmatmul.bf16.gmra.mxu0 %v155
    %v215 = vpop.f32.mrf.mxu0
    %v216 = vadd.f32 %v145, %v215
    %v217 = vpop.f32.mrf.mxu0
    %v218 = vadd.f32 %v145, %v217
    %219 = vmatmul.bf16.gmra.mxu0 %v158
    %v220 = vpop.f32.mrf.mxu0
    %v221 = vadd.f32 %v145, %v220
    %v222 = vpop.f32.mrf.mxu0
    %v223 = vadd.f32 %v145, %v222
    %224 = vmatmul.bf16.gmra.mxu0 %v161
    %v225 = vpop.f32.mrf.mxu0
    %v226 = vadd.f32 %v145, %v225
    %v227 = vpop.f32.mrf.mxu0
    %v228 = vadd.f32 %v145, %v227
    %229 = vmatmul.bf16.gmra.mxu0 %v164
    %v230 = vpop.f32.mrf.mxu0
    %v231 = vadd.f32 %v145, %v230
    %v232 = vpop.f32.mrf.mxu0
    %v233 = vadd.f32 %v145, %v232
    %234 = vmatmul.bf16.gmra.mxu0 %v167
    %v235 = vpop.f32.mrf.mxu0
    %v236 = vadd.f32 %v145, %v235
    %v237 = vpop.f32.mrf.mxu0
    %v238 = vadd.f32 %v145, %v237
    %239 = vmatmul.bf16.gmra.mxu0 %v170
    %v240 = vpop.f32.mrf.mxu0
    %v241 = vadd.f32 %v145, %v240
    %v242 = vpop.f32.mrf.mxu0
    %v243 = vadd.f32 %v145, %v242
    %244 = vmatmul.bf16.gmra.mxu0 %v173
    %v245 = vpop.f32.mrf.mxu0
    %v246 = vadd.f32 %v145, %v245
    %v247 = vpop.f32.mrf.mxu0
    %v248 = vadd.f32 %v145, %v247
    %249 = vmatmul.bf16.gmra.mxu0 %v176
    %v250 = vpop.f32.mrf.mxu0
    %v251 = vadd.f32 %v145, %v250
    %v252 = vpop.f32.mrf.mxu0
    %v253 = vadd.f32 %v145, %v252
    %254 = vmatmul.bf16.gmra.mxu0 %v179
    %v255 = vpop.f32.mrf.mxu0
    %v256 = vadd.f32 %v145, %v255
    %v257 = vpop.f32.mrf.mxu0
    %v258 = vadd.f32 %v145, %v257
    %259 = vmatmul.bf16.gmra.mxu0 %v182
    %v260 = vpop.f32.mrf.mxu0
    %v261 = vadd.f32 %v145, %v260
    %v262 = vpop.f32.mrf.mxu0
    %v263 = vadd.f32 %v145, %v262
    %264 = vmatmul.bf16.gmra.mxu0 %v185
    %v265 = vpop.f32.mrf.mxu0
    %v266 = vadd.f32 %v145, %v265
    %v267 = vpop.f32.mrf.mxu0
    %v268 = vadd.f32 %v145, %v267
    %269 = vmatmul.bf16.gmra.mxu0 %v188
    %v270 = vpop.f32.mrf.mxu0
    %v271 = vadd.f32 %v145, %v270
    %v272 = vpop.f32.mrf.mxu0
    %v273 = vadd.f32 %v145, %v272
    %274 = vmatmul.bf16.gmra.mxu0 %v191
    %v275 = vpop.f32.mrf.mxu0
    %v276 = vadd.f32 %v145, %v275
    %v277 = vpop.f32.mrf.mxu0
    %v278 = vadd.f32 %v145, %v277
    %279 = vmatmul.bf16.gmra.mxu0 %v194
    %v280 = vpop.f32.mrf.mxu0
    %v281 = vadd.f32 %v145, %v280
    %v282 = vpop.f32.mrf.mxu0
    %v283 = vadd.f32 %v145, %v282
    %284 = vdwg.mxu0
    %v285 = vld [vmem:[%s4] sm:$0xff]
    %v286 = vld [vmem:[%s4 + $0x8] sm:$0xff]
    %v287 = vld [vmem:[%s4 + $0x10] sm:$0xff]
    %v288 = vld [vmem:[%s4 + $0x18] sm:$0xff]
    %v289 = vld [vmem:[%s4 + $0x20] sm:$0xff]
    %v290 = vld [vmem:[%s4 + $0x28] sm:$0xff]
    %v291 = vld [vmem:[%s4 + $0x30] sm:$0xff]
    %v292 = vld [vmem:[%s4 + $0x38] sm:$0xff]
    %v293 = vpack.c.bf16 %v286, %v285
    %v294 = vpack.c.bf16 %v288, %v287
    %v295 = vpack.c.bf16 %v290, %v289
    %v296 = vpack.c.bf16 %v292, %v291
    %v297 = vld [vmem:[%s5] sm:$0x1]
    %v299 = vperm.slane %v297, 0
    %v302 = vsel %vm147, %v115, 0
    %v305 = vsel %vm147, %v116, 0
    %v308 = vsel %vm147, %v117, 0
    %v311 = vsel %vm147, %v118, 0
    %v314 = vsel %vm147, %v119, 0
    %v317 = vsel %vm147, %v120, 0
    %v320 = vsel %vm147, %v121, 0
    %v323 = vsel %vm147, %v122, 0
    %v326 = vsel %vm147, %v123, 0
    %v329 = vsel %vm147, %v124, 0
    %v332 = vsel %vm147, %v125, 0
    %v335 = vsel %vm147, %v126, 0
    %v338 = vsel %vm147, %v127, 0
    %v341 = vsel %vm147, %v128, 0
    %v344 = vsel %vm147, %v129, 0
    %v347 = vsel %vm147, %v130, 0
    %349 = vmatpush.bf16.msra.mxu0 0
    %350 = vmatpush.bf16.msra.mxu0 0
    %351 = vmatpush.bf16.msra.mxu0 0
    %352 = vmatpush.bf16.msra.mxu0 0
    %353 = vmatpush.bf16.msra.mxu0 %v296
    %354 = vmatpush.bf16.msra.mxu0 %v295
    %355 = vmatpush.bf16.msra.mxu0 %v294
    %356 = vmatpush.bf16.msra.mxu0 %v293
    %357 = vmatmul.bf16.gmra.mxu0 %v302
    %v358 = vpop.f32.mrf.mxu0
    %v359 = vadd.f32 %v299, %v358
    %v360 = vpop.f32.mrf.mxu0
    %v361 = vadd.f32 %v299, %v360
    %362 = vmatmul.bf16.gmra.mxu0 %v305
    %v363 = vpop.f32.mrf.mxu0
    %v364 = vadd.f32 %v299, %v363
    %v365 = vpop.f32.mrf.mxu0
    %v366 = vadd.f32 %v299, %v365
    %367 = vmatmul.bf16.gmra.mxu0 %v308
    %v368 = vpop.f32.mrf.mxu0
    %v369 = vadd.f32 %v299, %v368
    %v370 = vpop.f32.mrf.mxu0
    %v371 = vadd.f32 %v299, %v370
    %372 = vmatmul.bf16.gmra.mxu0 %v311
    %v373 = vpop.f32.mrf.mxu0
    %v374 = vadd.f32 %v299, %v373
    %v375 = vpop.f32.mrf.mxu0
    %v376 = vadd.f32 %v299, %v375
    %377 = vmatmul.bf16.gmra.mxu0 %v314
    %v378 = vpop.f32.mrf.mxu0
    %v379 = vadd.f32 %v299, %v378
    %v380 = vpop.f32.mrf.mxu0
    %v381 = vadd.f32 %v299, %v380
    %382 = vmatmul.bf16.gmra.mxu0 %v317
    %v383 = vpop.f32.mrf.mxu0
    %v384 = vadd.f32 %v299, %v383
    %v385 = vpop.f32.mrf.mxu0
    %v386 = vadd.f32 %v299, %v385
    %387 = vmatmul.bf16.gmra.mxu0 %v320
    %v388 = vpop.f32.mrf.mxu0
    %v389 = vadd.f32 %v299, %v388
    %v390 = vpop.f32.mrf.mxu0
    %v391 = vadd.f32 %v299, %v390
    %392 = vmatmul.bf16.gmra.mxu0 %v323
    %v393 = vpop.f32.mrf.mxu0
    %v394 = vadd.f32 %v299, %v393
    %v395 = vpop.f32.mrf.mxu0
    %v396 = vadd.f32 %v299, %v395
    %397 = vmatmul.bf16.gmra.mxu0 %v326
    %v398 = vpop.f32.mrf.mxu0
    %v399 = vadd.f32 %v299, %v398
    %v400 = vpop.f32.mrf.mxu0
    %v401 = vadd.f32 %v299, %v400
    %402 = vmatmul.bf16.gmra.mxu0 %v329
    %v403 = vpop.f32.mrf.mxu0
    %v404 = vadd.f32 %v299, %v403
    %v405 = vpop.f32.mrf.mxu0
    %v406 = vadd.f32 %v299, %v405
    %407 = vmatmul.bf16.gmra.mxu0 %v332
    %v408 = vpop.f32.mrf.mxu0
    %v409 = vadd.f32 %v299, %v408
    %v410 = vpop.f32.mrf.mxu0
    %v411 = vadd.f32 %v299, %v410
    %412 = vmatmul.bf16.gmra.mxu0 %v335
    %v413 = vpop.f32.mrf.mxu0
    %v414 = vadd.f32 %v299, %v413
    %v415 = vpop.f32.mrf.mxu0
    %v416 = vadd.f32 %v299, %v415
    %417 = vmatmul.bf16.gmra.mxu0 %v338
    %v418 = vpop.f32.mrf.mxu0
    %v419 = vadd.f32 %v299, %v418
    %v420 = vpop.f32.mrf.mxu0
    %v421 = vadd.f32 %v299, %v420
    %422 = vmatmul.bf16.gmra.mxu0 %v341
    %v423 = vpop.f32.mrf.mxu0
    %v424 = vadd.f32 %v299, %v423
    %v425 = vpop.f32.mrf.mxu0
    %v426 = vadd.f32 %v299, %v425
    %427 = vmatmul.bf16.gmra.mxu0 %v344
    %v428 = vpop.f32.mrf.mxu0
    %v429 = vadd.f32 %v299, %v428
    %v430 = vpop.f32.mrf.mxu0
    %v431 = vadd.f32 %v299, %v430
    %432 = vmatmul.bf16.gmra.mxu0 %v347
    %v433 = vpop.f32.mrf.mxu0
    %v434 = vadd.f32 %v299, %v433
    %v435 = vpop.f32.mrf.mxu0
    %v436 = vadd.f32 %v299, %v435
    %437 = vdwg.mxu0
    %v438 = vpack.c.bf16 %v208, %v206
    %v439 = vpack.c.bf16 %v213, %v211
    %v440 = vpack.c.bf16 %v218, %v216
    %v441 = vpack.c.bf16 %v223, %v221
    %v442 = vpack.c.bf16 %v228, %v226
    %v443 = vpack.c.bf16 %v233, %v231
    %v444 = vpack.c.bf16 %v238, %v236
    %v445 = vpack.c.bf16 %v243, %v241
    %v446 = vpack.c.bf16 %v248, %v246
    %v447 = vpack.c.bf16 %v253, %v251
    %v448 = vpack.c.bf16 %v258, %v256
    %v449 = vpack.c.bf16 %v263, %v261
    %v450 = vpack.c.bf16 %v268, %v266
    %v451 = vpack.c.bf16 %v273, %v271
    %v452 = vpack.c.bf16 %v278, %v276
    %v453 = vpack.c.bf16 %v283, %v281
    %v454 = vld [vmem:[%s6] sm:$0xff]
    %v455 = vld [vmem:[%s6 + $0x8] sm:$0xff]
    %v456 = vld [vmem:[%s6 + $0x10] sm:$0xff]
    %v457 = vld [vmem:[%s6 + $0x18] sm:$0xff]
    %v458 = vld [vmem:[%s6 + $0x20] sm:$0xff]
    %v459 = vld [vmem:[%s6 + $0x28] sm:$0xff]
    %v460 = vld [vmem:[%s6 + $0x30] sm:$0xff]
    %v461 = vld [vmem:[%s6 + $0x38] sm:$0xff]
    %v462 = vpack.c.bf16 %v455, %v454
    %v463 = vpack.c.bf16 %v457, %v456
    %v464 = vpack.c.bf16 %v459, %v458
    %v465 = vpack.c.bf16 %v461, %v460
    %v466 = vld [vmem:[%s7] sm:$0x1]
    %v467 = vpack.c.bf16 %v466, %v466
    %v469 = vsel %vm147, %v462, 0
    %v472 = vsel %vm147, %v463, 0
    %v475 = vsel %vm147, %v464, 0
    %v478 = vsel %vm147, %v465, 0
    %v481 = vsel %vm147, %v438, 0
    %v484 = vsel %vm147, %v439, 0
    %v487 = vsel %vm147, %v440, 0
    %v490 = vsel %vm147, %v441, 0
    %v493 = vsel %vm147, %v442, 0
    %v496 = vsel %vm147, %v443, 0
    %v499 = vsel %vm147, %v444, 0
    %v502 = vsel %vm147, %v445, 0
    %v505 = vsel %vm147, %v446, 0
    %v508 = vsel %vm147, %v447, 0
    %v511 = vsel %vm147, %v448, 0
    %v514 = vsel %vm147, %v449, 0
    %v517 = vsel %vm147, %v450, 0
    %v520 = vsel %vm147, %v451, 0
    %v523 = vsel %vm147, %v452, 0
    %v526 = vsel %vm147, %v453, 0
    %528 = vmatpush.bf16.xpose.msra.mxu0 %v502
    %529 = vmatpush.bf16.xpose.msra.mxu0 %v499
    %530 = vmatpush.bf16.xpose.msra.mxu0 %v496
    %531 = vmatpush.bf16.xpose.msra.mxu0 %v493
    %532 = vmatpush.bf16.xpose.msra.mxu0 %v490
    %533 = vmatpush.bf16.xpose.msra.mxu0 %v487
    %534 = vmatpush.bf16.xpose.msra.mxu0 %v484
    %535 = vmatpush.bf16.xpose.msra.mxu0 %v481
    %536 = vmatmul.bf16.gmra.mxu0 %v469
    %v537 = vpop.f32.mrf.mxu0
    %v538 = vadd.f32 0.0, %v537
    %v539 = vpop.f32.mrf.mxu0
    %v540 = vadd.f32 0.0, %v539
    %541 = vmatmul.bf16.gmra.mxu0 %v472
    %v542 = vpop.f32.mrf.mxu0
    %v543 = vadd.f32 0.0, %v542
    %v544 = vpop.f32.mrf.mxu0
    %v545 = vadd.f32 0.0, %v544
    %546 = vmatmul.bf16.gmra.mxu0 %v475
    %v547 = vpop.f32.mrf.mxu0
    %v548 = vadd.f32 0.0, %v547
    %v549 = vpop.f32.mrf.mxu0
    %v550 = vadd.f32 0.0, %v549
    %551 = vmatmul.bf16.gmra.mxu0 %v478
    %v552 = vpop.f32.mrf.mxu0
    %v553 = vadd.f32 0.0, %v552
    %v554 = vpop.f32.mrf.mxu0
    %v555 = vadd.f32 0.0, %v554
    %556 = vdwg.mxu0
    %557 = vmatpush.bf16.xpose.msra.mxu0 %v526
    %558 = vmatpush.bf16.xpose.msra.mxu0 %v523
    %559 = vmatpush.bf16.xpose.msra.mxu0 %v520
    %560 = vmatpush.bf16.xpose.msra.mxu0 %v517
    %561 = vmatpush.bf16.xpose.msra.mxu0 %v514
    %562 = vmatpush.bf16.xpose.msra.mxu0 %v511
    %563 = vmatpush.bf16.xpose.msra.mxu0 %v508
    %564 = vmatpush.bf16.xpose.msra.mxu0 %v505
    %565 = vmatmul.bf16.gmra.mxu0 %v469
    %v566 = vpop.f32.mrf.mxu0
    %v567 = vadd.f32 0.0, %v566
    %v568 = vpop.f32.mrf.mxu0
    %v569 = vadd.f32 0.0, %v568
    %570 = vmatmul.bf16.gmra.mxu0 %v472
    %v571 = vpop.f32.mrf.mxu0
    %v572 = vadd.f32 0.0, %v571
    %v573 = vpop.f32.mrf.mxu0
    %v574 = vadd.f32 0.0, %v573
    %575 = vmatmul.bf16.gmra.mxu0 %v475
    %v576 = vpop.f32.mrf.mxu0
    %v577 = vadd.f32 0.0, %v576
    %v578 = vpop.f32.mrf.mxu0
    %v579 = vadd.f32 0.0, %v578
    %580 = vmatmul.bf16.gmra.mxu0 %v478
    %v581 = vpop.f32.mrf.mxu0
    %v582 = vadd.f32 0.0, %v581
    %v583 = vpop.f32.mrf.mxu0
    %v584 = vadd.f32 0.0, %v583
    %585 = vdwg.mxu0
    %v587 = vsel %vm147, %v467, 0
    %589 = vmatpush.bf16.xpose.msra.mxu0 %v502
    %590 = vmatpush.bf16.xpose.msra.mxu0 %v499
    %591 = vmatpush.bf16.xpose.msra.mxu0 %v496
    %592 = vmatpush.bf16.xpose.msra.mxu0 %v493
    %593 = vmatpush.bf16.xpose.msra.mxu0 %v490
    %594 = vmatpush.bf16.xpose.msra.mxu0 %v487
    %595 = vmatpush.bf16.xpose.msra.mxu0 %v484
    %596 = vmatpush.bf16.xpose.msra.mxu0 %v481
    %597 = vmatmul.bf16.gmra.mxu0 %v587
    %v598 = vpop.f32.mrf.mxu0
    %v599 = vadd.f32 0.0, %v598
    %v600 = vpop.f32.mrf.mxu0
    %601 = vdwg.mxu0
    %602 = vmatpush.bf16.xpose.msra.mxu0 %v526
    %603 = vmatpush.bf16.xpose.msra.mxu0 %v523
    %604 = vmatpush.bf16.xpose.msra.mxu0 %v520
    %605 = vmatpush.bf16.xpose.msra.mxu0 %v517
    %606 = vmatpush.bf16.xpose.msra.mxu0 %v514
    %607 = vmatpush.bf16.xpose.msra.mxu0 %v511
    %608 = vmatpush.bf16.xpose.msra.mxu0 %v508
    %609 = vmatpush.bf16.xpose.msra.mxu0 %v505
    %610 = vmatmul.bf16.gmra.mxu0 %v587
    %v611 = vpop.f32.mrf.mxu0
    %v612 = vadd.f32 0.0, %v611
    %v613 = vpop.f32.mrf.mxu0
    %614 = vdwg.mxu0
    %v615 = vpack.c.bf16 %v567, %v538
    %v616 = vpack.c.bf16 %v569, %v540
    %v617 = vpack.c.bf16 %v572, %v543
    %v618 = vpack.c.bf16 %v574, %v545
    %v619 = vpack.c.bf16 %v577, %v548
    %v620 = vpack.c.bf16 %v579, %v550
    %v621 = vpack.c.bf16 %v582, %v553
    %v622 = vpack.c.bf16 %v584, %v555
    %623 = vst [vmem:[#allocation2] sm:$0xff] %v615
    %624 = vst [vmem:[#allocation2 + $0x8] sm:$0xff] %v616
    %625 = vst [vmem:[#allocation2 + $0x10] sm:$0xff] %v617
    %626 = vst [vmem:[#allocation2 + $0x18] sm:$0xff] %v618
    %627 = vst [vmem:[#allocation2 + $0x20] sm:$0xff] %v619
    %628 = vst [vmem:[#allocation2 + $0x28] sm:$0xff] %v620
    %629 = vst [vmem:[#allocation2 + $0x30] sm:$0xff] %v621
    %630 = vst [vmem:[#allocation2 + $0x38] sm:$0xff] %v622
    %v633 = vrot.slane %v612, 7
    %vm634 = vcmask 1040384
    %v635 = vsel %vm634, %v599, %v633
    %v637 = vlaneseq
    %vm638 = vcmp.ge.s32.totalorder %v637, 0
    %vm639 = vcmp.lt.s32.totalorder %v637, 256
    %vm640 = vmand %vm638, %vm639
    %641 = vst.msk [vmem:[#allocation4] sm:$0x3] %vm640, %v635
    %v642 = vpack.c.bf16 %v359, %v359
    %v643 = vpack.c.bf16 %v361, %v361
    %v644 = vpack.c.bf16 %v364, %v364
    %v645 = vpack.c.bf16 %v366, %v366
    %v646 = vpack.c.bf16 %v369, %v369
    %v647 = vpack.c.bf16 %v371, %v371
    %v648 = vpack.c.bf16 %v374, %v374
    %v649 = vpack.c.bf16 %v376, %v376
    %v650 = vpack.c.bf16 %v379, %v379
    %v651 = vpack.c.bf16 %v381, %v381
    %v652 = vpack.c.bf16 %v384, %v384
    %v653 = vpack.c.bf16 %v386, %v386
    %v654 = vpack.c.bf16 %v389, %v389
    %v655 = vpack.c.bf16 %v391, %v391
    %v656 = vpack.c.bf16 %v394, %v394
    %v657 = vpack.c.bf16 %v396, %v396
    %v658 = vpack.c.bf16 %v399, %v399
    %v659 = vpack.c.bf16 %v401, %v401
    %v660 = vpack.c.bf16 %v404, %v404
    %v661 = vpack.c.bf16 %v406, %v406
    %v662 = vpack.c.bf16 %v409, %v409
    %v663 = vpack.c.bf16 %v411, %v411
    %v664 = vpack.c.bf16 %v414, %v414
    %v665 = vpack.c.bf16 %v416, %v416
    %v666 = vpack.c.bf16 %v419, %v419
    %v667 = vpack.c.bf16 %v421, %v421
    %v668 = vpack.c.bf16 %v424, %v424
    %v669 = vpack.c.bf16 %v426, %v426
    %v670 = vpack.c.bf16 %v429, %v429
    %v671 = vpack.c.bf16 %v431, %v431
    %v672 = vpack.c.bf16 %v434, %v434
    %v673 = vpack.c.bf16 %v436, %v436
    %vm674 = vcmask 519168
    %675 = vst.msk [vmem:[%s10] sm:$0xf] %vm674, %v642
    %676 = vst.msk [vmem:[%s10 + $0x4] sm:$0xf] %vm674, %v643
    %677 = vst.msk [vmem:[%s10 + $0x8] sm:$0xf] %vm674, %v644
    %678 = vst.msk [vmem:[%s10 + $0xc] sm:$0xf] %vm674, %v645
    %679 = vst.msk [vmem:[%s10 + $0x10] sm:$0xf] %vm674, %v646
    %680 = vst.msk [vmem:[%s10 + $0x14] sm:$0xf] %vm674, %v647
    %681 = vst.msk [vmem:[%s10 + $0x18] sm:$0xf] %vm674, %v648
    %682 = vst.msk [vmem:[%s10 + $0x1c] sm:$0xf] %vm674, %v649
    %683 = vst.msk [vmem:[%s10 + $0x20] sm:$0xf] %vm674, %v650
    %684 = vst.msk [vmem:[%s10 + $0x24] sm:$0xf] %vm674, %v651
    %685 = vst.msk [vmem:[%s10 + $0x28] sm:$0xf] %vm674, %v652
    %686 = vst.msk [vmem:[%s10 + $0x2c] sm:$0xf] %vm674, %v653
    %687 = vst.msk [vmem:[%s10 + $0x30] sm:$0xf] %vm674, %v654
    %688 = vst.msk [vmem:[%s10 + $0x34] sm:$0xf] %vm674, %v655
    %689 = vst.msk [vmem:[%s10 + $0x38] sm:$0xf] %vm674, %v656
    %690 = vst.msk [vmem:[%s10 + $0x3c] sm:$0xf] %vm674, %v657
    %691 = vst.msk [vmem:[%s10 + $0x40] sm:$0xf] %vm674, %v658
    %692 = vst.msk [vmem:[%s10 + $0x44] sm:$0xf] %vm674, %v659
    %693 = vst.msk [vmem:[%s10 + $0x48] sm:$0xf] %vm674, %v660
    %694 = vst.msk [vmem:[%s10 + $0x4c] sm:$0xf] %vm674, %v661
    %695 = vst.msk [vmem:[%s10 + $0x50] sm:$0xf] %vm674, %v662
    %696 = vst.msk [vmem:[%s10 + $0x54] sm:$0xf] %vm674, %v663
    %697 = vst.msk [vmem:[%s10 + $0x58] sm:$0xf] %vm674, %v664
    %698 = vst.msk [vmem:[%s10 + $0x5c] sm:$0xf] %vm674, %v665
    %699 = vst.msk [vmem:[%s10 + $0x60] sm:$0xf] %vm674, %v666
    %700 = vst.msk [vmem:[%s10 + $0x64] sm:$0xf] %vm674, %v667
    %701 = vst.msk [vmem:[%s10 + $0x68] sm:$0xf] %vm674, %v668
    %702 = vst.msk [vmem:[%s10 + $0x6c] sm:$0xf] %vm674, %v669
    %703 = vst.msk [vmem:[%s10 + $0x70] sm:$0xf] %vm674, %v670
    %704 = vst.msk [vmem:[%s10 + $0x74] sm:$0xf] %vm674, %v671
    %705 = vst.msk [vmem:[%s10 + $0x78] sm:$0xf] %vm674, %v672
    %706 = vst.msk [vmem:[%s10 + $0x7c] sm:$0xf] %vm674, %v673
    // Predicated region
    $region34: #{tpu_custom_call.1} parent=1 // pred_check
      _
    $region35: #{tpu_custom_call.1} parent=1 // pred_check_branch
      %708 = sbr.rel (0) target = $region37
    $region36: #{tpu_custom_call.1} parent=1 // pred_region
      %710 = vsyncadd [#allocation3], 0
      %s711 = sshll.u32 [#allocation2], 4
      %s712 = int_to_ptr.vmem [resolvable:$true] %s711
      %s713 = sshll.u32 %s8, 4
      %s714 = int_to_ptr.hbm [resolvable:$true] %s713
      %719 = dma.vmem_to_hbm [thread:$0]  %s712, 1024, %s714, [#allocation3], 128, 128, 8
    $region37: #{tpu_custom_call.1} parent=1 // pred_fallthru
      _
    // Predicated region
    $region38: #{tpu_custom_call.1} parent=1 // pred_check
      _
    $region39: #{tpu_custom_call.1} parent=1 // pred_check_branch
      %721 = sbr.rel (0) target = $region41
    $region40: #{tpu_custom_call.1} parent=1 // pred_region
      %723 = vsyncadd [#allocation5], 0
      %s725 = sshll.u32 [#allocation4], 4
      %s726 = int_to_ptr.vmem [resolvable:$true] %s725
      %s727 = sshll.u32 %s9, 4
      %s728 = int_to_ptr.hbm [resolvable:$true] %s727
      %730 = dma.vmem_to_hbm [thread:$0]  %s726, 32, %s728, [#allocation5]
    $region41: #{tpu_custom_call.1} parent=1 // pred_fallthru
      _
    // Predicated region
    $region42: #{tpu_custom_call.1} parent=1 // pred_check
      _
    $region43: #{tpu_custom_call.1} parent=1 // pred_check_branch
      %732 = sbr.rel (0) target = $region45
    $region44: #{tpu_custom_call.1} parent=1 // pred_region
      _
    $region45: #{tpu_custom_call.1} parent=1 // pred_fallthru
      _
    // Predicated region
    $region46: #{tpu_custom_call.1} parent=1 // pred_check
      _
    $region47: #{tpu_custom_call.1} parent=1 // pred_check_branch
      %734 = sbr.rel (0) target = $region49
    $region48: #{tpu_custom_call.1} parent=1 // pred_region
      %736 = dma.done [#allocation3], 1024
    $region49: #{tpu_custom_call.1} parent=1 // pred_fallthru
      _
    // Predicated region
    $region50: #{tpu_custom_call.1} parent=1 // pred_check
      _
    $region51: #{tpu_custom_call.1} parent=1 // pred_check_branch
      %738 = sbr.rel (0) target = $region53
    $region52: #{tpu_custom_call.1} parent=1 // pred_region
      %740 = dma.done [#allocation5], 32
    $region53: #{tpu_custom_call.1} parent=1 // pred_fallthru
      _
    // Predicated region
    $region54: #{tpu_custom_call.1} parent=1 // pred_check
      _
    $region55: #{tpu_custom_call.1} parent=1 // pred_check_branch
      %742 = sbr.rel (0) target = $region57
    $region56: #{tpu_custom_call.1} parent=1 // pred_region
      _
    $region57: #{tpu_custom_call.1} parent=1 // pred_fallthru
      _
    %743 = vsyncpa [#allocation3], 1
    %744 = vsyncpa [#allocation5], 1

</llo_original>
